<compile_context>
chip_gen: v7x
topology: tpu7x:2x2x1
jax: 0.10.0
libtpu: 0.0.40
codegen_flags: <defaults>
</compile_context>

<pallas_src>
import jax
import jax.numpy as jnp
from jax.experimental import pallas as pl
from jax.experimental.pallas import tpu as pltpu


_MAX_TILE_B = 512  # large-batch tile size (sweepable: 256/512)


def _round_up(x, m):
    return ((x + m - 1) // m) * m


def dqn_kernel(x_ref,
               w1_ref, b1_ref,
               w2_ref, b2_ref,
               w3_ref, b3_ref,
               w4_ref, b4_ref,
               o_ref,
               h_ref):
    """One batch tile: four fused dense layers, ReLU on the first three.

    h_ref is a (tile_b, 256) bf16 VMEM scratch used to stage inter-layer
    activations: the f32->bf16 cast fuses into the store and the next layer's
    MXU LHS is fed from VMEM instead of long-lived f32 vregs.
    """

    def dense(lhs, w_ref, b_ref):
        # bf16 operands, f32 accumulation; bias add in f32.
        return jnp.dot(lhs, w_ref[...],
                       preferred_element_type=jnp.float32) + b_ref[...]

    d1 = w1_ref.shape[1]
    d2 = w2_ref.shape[1]
    d3 = w3_ref.shape[1]

    # Layer 1: x streams in as f32; cast to the weight dtype at the MXU input.
    y = dense(x_ref[...].astype(w1_ref.dtype), w1_ref, b1_ref)
    h_ref[:, :d1] = jnp.maximum(y, 0.0).astype(h_ref.dtype)

    # Layer 2.
    y = dense(h_ref[:, :d1], w2_ref, b2_ref)
    h_ref[:, :d2] = jnp.maximum(y, 0.0).astype(h_ref.dtype)

    # Layer 3.
    y = dense(h_ref[:, :d2], w3_ref, b3_ref)
    h_ref[:, :d3] = jnp.maximum(y, 0.0).astype(h_ref.dtype)

    # Layer 4 (no ReLU): lane-dense padded output, bf16 store halves writeback.
    o_ref[...] = dense(h_ref[:, :d3], w4_ref, b4_ref).astype(o_ref.dtype)


def prepare_params(params, matmul_dtype=jnp.bfloat16):
    """Cast weights to the matmul dtype and zero-pad the last layer to a
    lane-dense (multiple-of-128) width.  Do this ONCE and reuse across calls
    (matters for the small-batch / acting path, which is launch-latency
    bound).  Returns (prepared_params, n_actions)."""
    n_actions = params["w4"].shape[1]
    n_out_pad = _round_up(max(n_actions, 128), 128)
    pad = n_out_pad - n_actions
    prepped = {
        "w1": params["w1"].astype(matmul_dtype),
        "w2": params["w2"].astype(matmul_dtype),
        "w3": params["w3"].astype(matmul_dtype),
        "w4": jnp.pad(params["w4"], ((0, 0), (0, pad))).astype(matmul_dtype),
        # Biases stay f32: they add onto the f32 accumulator.
        "b1": params["b1"].astype(jnp.float32),
        "b2": params["b2"].astype(jnp.float32),
        "b3": params["b3"].astype(jnp.float32),
        "b4": jnp.pad(params["b4"].astype(jnp.float32), ((0, 0), (0, pad))),
    }
    return prepped, n_actions


def _pick_tiling(B):
    """Batch tiling policy (see header).  Returns (tile_b, n_tiles)."""
    if B <= 128:
        return _round_up(max(B, 8), 8), 1
    if B <= 2 * _MAX_TILE_B:
        # Exactly two balanced tiles -> even split across v7x's 2 TensorCores.
        return _round_up(-(-B // 2), 8), 2
    return _MAX_TILE_B, -(-B // _MAX_TILE_B)


def dqn_apply(x, p, n_actions):
    """x: [B, n_observations] f32; p: output of prepare_params."""
    B, n_obs = x.shape
    n_out_pad = p["w4"].shape[1]
    d_hidden = max(p["w1"].shape[1], p["w2"].shape[1], p["w3"].shape[1])

    tile_b, n_tiles = _pick_tiling(B)
    B_pad = tile_b * n_tiles
    if B_pad != B:
        x = jnp.pad(x, ((0, B_pad - B), (0, 0)))

    x_spec = pl.BlockSpec((tile_b, n_obs), lambda i: (i, 0))
    out_spec = pl.BlockSpec((tile_b, n_out_pad), lambda i: (i, 0))

    def resident(arr):
        # Constant index_map -> block reused across all grid steps (no re-DMA).
        return pl.BlockSpec(arr.shape, lambda i: (0, 0))

    args = (x, p["w1"], p["b1"], p["w2"], p["b2"],
            p["w3"], p["b3"], p["w4"], p["b4"])
    in_specs = [x_spec,
                resident(p["w1"]), resident(p["b1"]),
                resident(p["w2"]), resident(p["b2"]),
                resident(p["w3"]), resident(p["b3"]),
                resident(p["w4"]), resident(p["b4"])]

    out = pl.pallas_call(
        dqn_kernel,
        out_shape=jax.ShapeDtypeStruct((B_pad, n_out_pad), jnp.bfloat16),
        grid_spec=pltpu.PrefetchScalarGridSpec(
            num_scalar_prefetch=0,
            grid=(n_tiles,),
            in_specs=in_specs,
            out_specs=out_spec,
            scratch_shapes=[pltpu.VMEM((tile_b, d_hidden), p["w1"].dtype)]),
        compiler_params=pltpu.CompilerParams(
            dimension_semantics=("parallel",)),  # batch tiles shard over v7x TCs
    )(*args)

    # Slice away batch/column padding and restore the module's f32 output dtype.
    return out[:B, :n_actions].astype(jnp.float32)


def dqn_forward(x, params, *, matmul_dtype=jnp.bfloat16):
    """Convenience wrapper: prepare (cast/pad) params, then run the kernel."""
    prepped, n_actions = prepare_params(params, matmul_dtype)
    return dqn_apply(x, prepped, n_actions)


def init_params(key, n_observations, n_actions):
    """Deterministic init mimicking nn.Linear's uniform(-1/sqrt(fan_in), ...)."""
    dims = [(n_observations, 128), (128, 128), (128, 256), (256, n_actions)]
    params = {}
    for i, (fan_in, fan_out) in enumerate(dims, start=1):
        key, kw, kb = jax.random.split(key, 3)
        bound = 1.0 / (fan_in ** 0.5)
        params[f"w{i}"] = jax.random.uniform(
            kw, (fan_in, fan_out), jnp.float32, -bound, bound)
        params[f"b{i}"] = jax.random.uniform(
            kb, (1, fan_out), jnp.float32, -bound, bound)
    return params


def dqn_reference(x, p, matmul_dtype=jnp.float32):
    def dense(h, w, b, relu):
        y = jnp.dot(h.astype(matmul_dtype), w.astype(matmul_dtype),
                    preferred_element_type=jnp.float32) + b
        return jnp.maximum(y, 0.0) if relu else y

    h = dense(x, p["w1"], p["b1"], True)
    h = dense(h, p["w2"], p["b2"], True)
    h = dense(h, p["w3"], p["b3"], True)
    return dense(h, p["w4"], p["b4"], False)


if __name__ == "__main__":
    key = jax.random.PRNGKey(0)
    n_observations, n_actions, batch = 8, 4, 2

    key, kp = jax.random.split(key)
    params = init_params(kp, n_observations, n_actions)
    prepped, n_act = prepare_params(params)

    def check(batch_size, kx):
        x = jax.random.normal(kx, (batch_size, n_observations), jnp.float32)
        out = jax.block_until_ready(dqn_apply(x, prepped, n_act))
        assert out.shape == (batch_size, n_actions)
        assert out.dtype == jnp.float32

        # Authoritative check: same bf16-operand / f32-accumulate math as the
        # kernel, including the final bf16-store rounding.
        ref = dqn_reference(x, params, matmul_dtype=jnp.bfloat16)
        ref = ref.astype(jnp.bfloat16).astype(jnp.float32)
        assert jnp.allclose(out, ref, atol=1e-2, rtol=1e-2), \
            f"B={batch_size}: mismatch vs bf16-matmul JAX reference"

        # Looser sanity check vs the pure-f32 PyTorch semantics.
        ref_f32 = dqn_reference(x, params, matmul_dtype=jnp.float32)
        assert jnp.allclose(out, ref_f32, atol=5e-2, rtol=5e-2), \
            f"B={batch_size}: mismatch vs f32 JAX reference"

    # Small acting-path batch (single tile, grid=1).
    key, k1 = jax.random.split(key)
    check(batch, k1)

    # Moderate training-path batch (two balanced tiles, grid=2, parallel axis).
    key, k2 = jax.random.split(key)
    check(192, k2)

    print("KERNEL_OK")
</pallas_src>

<mosaic_0001>
module attributes {stable_mosaic.version = 11 : i64} {
  func.func @dqn_kernel(%arg0: i32, %arg1: memref<8x8xf32, #tpu.memory_space<vmem>>, %arg2: memref<8x128xbf16, #tpu.memory_space<vmem>>, %arg3: memref<1x128xf32, #tpu.memory_space<vmem>>, %arg4: memref<128x128xbf16, #tpu.memory_space<vmem>>, %arg5: memref<1x128xf32, #tpu.memory_space<vmem>>, %arg6: memref<128x256xbf16, #tpu.memory_space<vmem>>, %arg7: memref<1x256xf32, #tpu.memory_space<vmem>>, %arg8: memref<256x128xbf16, #tpu.memory_space<vmem>>, %arg9: memref<1x128xf32, #tpu.memory_space<vmem>>, %arg10: memref<8x128xbf16, #tpu.memory_space<vmem>>, %arg11: memref<8x256xbf16, #tpu.memory_space<vmem>>) attributes {dimension_semantics = [#tpu.dimension_semantics<parallel>], iteration_bounds = array<i64: 1>, scalar_prefetch = 0 : i64, scratch_operands = 1 : i64, tpu.core_type = #tpu.core_type<tc>, window_params = [{transform_indices = @transform_0, window_bounds = array<i64: 8, 8>}, {pipeline_mode = #tpu.pipeline_mode<synchronous>, transform_indices = @transform_1, window_bounds = array<i64: 8, 128>}, {pipeline_mode = #tpu.pipeline_mode<synchronous>, transform_indices = @transform_2, window_bounds = array<i64: 1, 128>}, {pipeline_mode = #tpu.pipeline_mode<synchronous>, transform_indices = @transform_3, window_bounds = array<i64: 128, 128>}, {pipeline_mode = #tpu.pipeline_mode<synchronous>, transform_indices = @transform_4, window_bounds = array<i64: 1, 128>}, {pipeline_mode = #tpu.pipeline_mode<synchronous>, transform_indices = @transform_5, window_bounds = array<i64: 128, 256>}, {pipeline_mode = #tpu.pipeline_mode<synchronous>, transform_indices = @transform_6, window_bounds = array<i64: 1, 256>}, {pipeline_mode = #tpu.pipeline_mode<synchronous>, transform_indices = @transform_7, window_bounds = array<i64: 256, 128>}, {pipeline_mode = #tpu.pipeline_mode<synchronous>, transform_indices = @transform_8, window_bounds = array<i64: 1, 128>}, {transform_indices = @transform_9, window_bounds = array<i64: 8, 128>}]} {
    %c0 = arith.constant 0 : index
    %c0_0 = arith.constant 0 : index
    %0 = vector.load %arg1[%c0, %c0_0] : memref<8x8xf32, #tpu.memory_space<vmem>>, vector<8x8xf32>
    %1 = arith.truncf %0 : vector<8x8xf32> to vector<8x8xbf16>
    %c0_1 = arith.constant 0 : index
    %c0_2 = arith.constant 0 : index
    %2 = vector.load %arg2[%c0_1, %c0_2] : memref<8x128xbf16, #tpu.memory_space<vmem>>, vector<8x128xbf16>
    %cst = arith.constant dense<0.000000e+00> : vector<8x128xf32>
    %3 = tpu.matmul %1, %2, %cst {dimension_numbers = #tpu.dot_dimension_numbers<[1], [0], [0], [1], [0, 0, 1, 1], [], []>} : vector<8x8xbf16>, vector<8x128xbf16>, vector<8x128xf32> -> vector<8x128xf32>
    %c0_3 = arith.constant 0 : index
    %c0_4 = arith.constant 0 : index
    %4 = vector.load %arg3[%c0_3, %c0_4] : memref<1x128xf32, #tpu.memory_space<vmem>>, vector<1x128xf32>
    %5 = vector.broadcast %4 : vector<1x128xf32> to vector<8x128xf32>
    %6 = arith.addf %3, %5 : vector<8x128xf32>
    %cst_5 = arith.constant 0.000000e+00 : f32
    %7 = vector.broadcast %cst_5 : f32 to vector<8x128xf32>
    %8 = arith.maximumf %6, %7 : vector<8x128xf32>
    %9 = arith.truncf %8 : vector<8x128xf32> to vector<8x128xbf16>
    %c0_6 = arith.constant 0 : index
    %c0_7 = arith.constant 0 : index
    %10 = vector.load %arg11[%c0_6, %c0_7] : memref<8x256xbf16, #tpu.memory_space<vmem>>, vector<8x128xbf16>
    tpu.vector_store %arg11[%c0_6, %c0_7], %9 {strides = array<i32>} : memref<8x256xbf16, #tpu.memory_space<vmem>>, vector<8x128xbf16>,
    %c0_8 = arith.constant 0 : index
    %c0_9 = arith.constant 0 : index
    %11 = vector.load %arg11[%c0_8, %c0_9] : memref<8x256xbf16, #tpu.memory_space<vmem>>, vector<8x128xbf16>
    %c0_10 = arith.constant 0 : index
    %c0_11 = arith.constant 0 : index
    %12 = vector.load %arg4[%c0_10, %c0_11] : memref<128x128xbf16, #tpu.memory_space<vmem>>, vector<128x128xbf16>
    %cst_12 = arith.constant dense<0.000000e+00> : vector<8x128xf32>
    %13 = tpu.matmul %11, %12, %cst_12 {dimension_numbers = #tpu.dot_dimension_numbers<[1], [0], [0], [1], [0, 0, 1, 1], [], []>} : vector<8x128xbf16>, vector<128x128xbf16>, vector<8x128xf32> -> vector<8x128xf32>
    %c0_13 = arith.constant 0 : index
    %c0_14 = arith.constant 0 : index
    %14 = vector.load %arg5[%c0_13, %c0_14] : memref<1x128xf32, #tpu.memory_space<vmem>>, vector<1x128xf32>
    %15 = vector.broadcast %14 : vector<1x128xf32> to vector<8x128xf32>
    %16 = arith.addf %13, %15 : vector<8x128xf32>
    %cst_15 = arith.constant 0.000000e+00 : f32
    %17 = vector.broadcast %cst_15 : f32 to vector<8x128xf32>
    %18 = arith.maximumf %16, %17 : vector<8x128xf32>
    %19 = arith.truncf %18 : vector<8x128xf32> to vector<8x128xbf16>
    %c0_16 = arith.constant 0 : index
    %c0_17 = arith.constant 0 : index
    %20 = vector.load %arg11[%c0_16, %c0_17] : memref<8x256xbf16, #tpu.memory_space<vmem>>, vector<8x128xbf16>
    tpu.vector_store %arg11[%c0_16, %c0_17], %19 {strides = array<i32>} : memref<8x256xbf16, #tpu.memory_space<vmem>>, vector<8x128xbf16>,
    %c0_18 = arith.constant 0 : index
    %c0_19 = arith.constant 0 : index
    %21 = vector.load %arg11[%c0_18, %c0_19] : memref<8x256xbf16, #tpu.memory_space<vmem>>, vector<8x128xbf16>
    %c0_20 = arith.constant 0 : index
    %c0_21 = arith.constant 0 : index
    %22 = vector.load %arg6[%c0_20, %c0_21] : memref<128x256xbf16, #tpu.memory_space<vmem>>, vector<128x256xbf16>
    %cst_22 = arith.constant dense<0.000000e+00> : vector<8x256xf32>
    %23 = tpu.matmul %21, %22, %cst_22 {dimension_numbers = #tpu.dot_dimension_numbers<[1], [0], [0], [1], [0, 0, 1, 1], [], []>} : vector<8x128xbf16>, vector<128x256xbf16>, vector<8x256xf32> -> vector<8x256xf32>
    %c0_23 = arith.constant 0 : index
    %c0_24 = arith.constant 0 : index
    %24 = vector.load %arg7[%c0_23, %c0_24] : memref<1x256xf32, #tpu.memory_space<vmem>>, vector<1x256xf32>
    %25 = vector.broadcast %24 : vector<1x256xf32> to vector<8x256xf32>
    %26 = arith.addf %23, %25 : vector<8x256xf32>
    %cst_25 = arith.constant 0.000000e+00 : f32
    %27 = vector.broadcast %cst_25 : f32 to vector<8x256xf32>
    %28 = arith.maximumf %26, %27 : vector<8x256xf32>
    %29 = arith.truncf %28 : vector<8x256xf32> to vector<8x256xbf16>
    %c0_26 = arith.constant 0 : index
    %c0_27 = arith.constant 0 : index
    %30 = vector.load %arg11[%c0_26, %c0_27] : memref<8x256xbf16, #tpu.memory_space<vmem>>, vector<8x256xbf16>
    tpu.vector_store %arg11[%c0_26, %c0_27], %29 {strides = array<i32>} : memref<8x256xbf16, #tpu.memory_space<vmem>>, vector<8x256xbf16>,
    %c0_28 = arith.constant 0 : index
    %c0_29 = arith.constant 0 : index
    %31 = vector.load %arg11[%c0_28, %c0_29] : memref<8x256xbf16, #tpu.memory_space<vmem>>, vector<8x256xbf16>
    %c0_30 = arith.constant 0 : index
    %c0_31 = arith.constant 0 : index
    %32 = vector.load %arg8[%c0_30, %c0_31] : memref<256x128xbf16, #tpu.memory_space<vmem>>, vector<256x128xbf16>
    %cst_32 = arith.constant dense<0.000000e+00> : vector<8x128xf32>
    %33 = tpu.matmul %31, %32, %cst_32 {dimension_numbers = #tpu.dot_dimension_numbers<[1], [0], [0], [1], [0, 0, 1, 1], [], []>} : vector<8x256xbf16>, vector<256x128xbf16>, vector<8x128xf32> -> vector<8x128xf32>
    %c0_33 = arith.constant 0 : index
    %c0_34 = arith.constant 0 : index
    %34 = vector.load %arg9[%c0_33, %c0_34] : memref<1x128xf32, #tpu.memory_space<vmem>>, vector<1x128xf32>
    %35 = vector.broadcast %34 : vector<1x128xf32> to vector<8x128xf32>
    %36 = arith.addf %33, %35 : vector<8x128xf32>
    %37 = arith.truncf %36 : vector<8x128xf32> to vector<8x128xbf16>
    %c0_35 = arith.constant 0 : index
    %c0_36 = arith.constant 0 : index
    %38 = vector.load %arg10[%c0_35, %c0_36] : memref<8x128xbf16, #tpu.memory_space<vmem>>, vector<8x128xbf16>
    tpu.vector_store %arg10[%c0_35, %c0_36], %37 {strides = array<i32>} : memref<8x128xbf16, #tpu.memory_space<vmem>>, vector<8x128xbf16>,
    return
  }
  func.func @transform_0(%arg0: i32) -> (i32, i32) {
    %c0_i32 = arith.constant 0 : i32
    %c0_i32_0 = arith.constant 0 : i32
    return %arg0, %c0_i32 : i32, i32
  }
  func.func @transform_1(%arg0: i32) -> (i32, i32) {
    %c0_i32 = arith.constant 0 : i32
    %c0_i32_0 = arith.constant 0 : i32
    %c0_i32_1 = arith.constant 0 : i32
    return %c0_i32, %c0_i32_0 : i32, i32
  }
  func.func @transform_2(%arg0: i32) -> (i32, i32) {
    %c0_i32 = arith.constant 0 : i32
    %c0_i32_0 = arith.constant 0 : i32
    %c0_i32_1 = arith.constant 0 : i32
    return %c0_i32, %c0_i32_0 : i32, i32
  }
  func.func @transform_3(%arg0: i32) -> (i32, i32) {
    %c0_i32 = arith.constant 0 : i32
    %c0_i32_0 = arith.constant 0 : i32
    %c0_i32_1 = arith.constant 0 : i32
    return %c0_i32, %c0_i32_0 : i32, i32
  }
  func.func @transform_4(%arg0: i32) -> (i32, i32) {
    %c0_i32 = arith.constant 0 : i32
    %c0_i32_0 = arith.constant 0 : i32
    %c0_i32_1 = arith.constant 0 : i32
    return %c0_i32, %c0_i32_0 : i32, i32
  }
  func.func @transform_5(%arg0: i32) -> (i32, i32) {
    %c0_i32 = arith.constant 0 : i32
    %c0_i32_0 = arith.constant 0 : i32
    %c0_i32_1 = arith.constant 0 : i32
    return %c0_i32, %c0_i32_0 : i32, i32
  }
  func.func @transform_6(%arg0: i32) -> (i32, i32) {
    %c0_i32 = arith.constant 0 : i32
    %c0_i32_0 = arith.constant 0 : i32
    %c0_i32_1 = arith.constant 0 : i32
    return %c0_i32, %c0_i32_0 : i32, i32
  }
  func.func @transform_7(%arg0: i32) -> (i32, i32) {
    %c0_i32 = arith.constant 0 : i32
    %c0_i32_0 = arith.constant 0 : i32
    %c0_i32_1 = arith.constant 0 : i32
    return %c0_i32, %c0_i32_0 : i32, i32
  }
  func.func @transform_8(%arg0: i32) -> (i32, i32) {
    %c0_i32 = arith.constant 0 : i32
    %c0_i32_0 = arith.constant 0 : i32
    %c0_i32_1 = arith.constant 0 : i32
    return %c0_i32, %c0_i32_0 : i32, i32
  }
  func.func @transform_9(%arg0: i32) -> (i32, i32) {
    %c0_i32 = arith.constant 0 : i32
    %c0_i32_0 = arith.constant 0 : i32
    return %arg0, %c0_i32 : i32, i32
  }
}

</mosaic_0001>

<llo_original>
// kernel: tpu_custom_call.1
$region0: #{tpu_custom_call.1}
  #allocation0 [shape = 'u32[]', space=smem, size = 0x4, offset = 0x4, fixed_abs, tag = 'smem constant byte address 0x4 - core index']
  #allocation1 [shape = 'u32[144,128]{1,0:T(1,128)}', space=vmem, size = 0x12000, scoped, tag = 'internal scratch']
  #allocation2 [shape = 'bf16[8,256]{1,0:T(8,128)(2,1)}', space=vmem, size = 0x1000, scoped, tag = 'scratch operand']
  %s0 = inlined_call_operand.hbm [shape: f32[8,8], index: 0, kind: input, shape index: {}]
  %s1 = inlined_call_operand.hbm [shape: bf16[8,128], index: 1, kind: input, shape index: {}]
  %s2 = inlined_call_operand.vmem [shape: f32[1,128], index: 2, kind: input, shape index: {}]
  %s3 = inlined_call_operand.hbm [shape: bf16[128,128], index: 3, kind: input, shape index: {}]
  %s4 = inlined_call_operand.vmem [shape: f32[1,128], index: 4, kind: input, shape index: {}]
  %s5 = inlined_call_operand.hbm [shape: bf16[128,256], index: 5, kind: input, shape index: {}]
  %s6 = inlined_call_operand.vmem [shape: f32[1,256], index: 6, kind: input, shape index: {}]
  %s7 = inlined_call_operand.hbm [shape: bf16[256,128], index: 7, kind: input, shape index: {}]
  %s8 = inlined_call_operand.vmem [shape: f32[1,128], index: 8, kind: input, shape index: {}]
  %s9 = inlined_call_operand.hbm [shape: bf16[8,128], index: 9, kind: output, shape index: {}]
  %s10 = sld [smem:[#allocation0]]
  $region66: #{tpu_custom_call.1} parent=0
    _
  %s12 = ssub.s32 1, %s10
  %s13 = scalar_select 0, %s12, %s10
  $region1: #{tpu_custom_call.1} parent=0
    #allocation3 [shape = 'u8[4096]{0}', space=vmem, size = 0x1000, scoped, tag = 'input window, operand 0, single buffered']
    #allocation4 [shape = 's32[1]{0}', space=sflag, size = 0x4, scoped, tag = 'scoped memory for tpu_custom_call.1']
    #allocation5 [shape = 's32[1]{0}', space=sflag, size = 0x4, scoped, tag = 'scoped memory for tpu_custom_call.1']
    #allocation6 [shape = 'u8[2048]{0}', space=vmem, size = 0x800, scoped, tag = 'input window, operand 1, single buffered']
    #allocation7 [shape = 's32[1]{0}', space=sflag, size = 0x4, scoped, tag = 'scoped memory for tpu_custom_call.1']
    #allocation8 [shape = 'u8[32768]{0}', space=vmem, size = 0x8000, scoped, tag = 'input window, operand 3, single buffered']
    #allocation9 [shape = 'u8[65536]{0}', space=vmem, size = 0x10000, scoped, tag = 'input window, operand 5, single buffered']
    #allocation10 [shape = 's32[1]{0}', space=sflag, size = 0x4, scoped, tag = 'scoped memory for tpu_custom_call.1']
    #allocation11 [shape = 'u8[65536]{0}', space=vmem, size = 0x10000, scoped, tag = 'input window, operand 7, single buffered']
    #allocation12 [shape = 'u8[2048]{0}', space=vmem, size = 0x800, scoped, tag = 'output window, operand 0, single buffered']
    %14 = vsyncpa [#allocation4], 0
    %15 = vsyncpa [#allocation7], 0
    %16 = vsyncpa [#allocation10], 0
    %17 = vsyncpa [#allocation5], 0
    // Predicated region
    $region2: #{tpu_custom_call.1} parent=1 // pred_check
      _
    $region3: #{tpu_custom_call.1} parent=1 // pred_check_branch
      %19 = sbr.rel (0) target = $region5
    $region4: #{tpu_custom_call.1} parent=1 // pred_region
      %s21 = ssub.s32 128, 128
      %22 = vsyncadd [#allocation4], %s21
      %s24 = sshll.u32 [#allocation3], 4
      %s25 = int_to_ptr.vmem [resolvable:$true] %s24
      %27 = dma.hbm_to_vmem [thread:$0]  %s0, 128, %s25, [#allocation4]
    $region5: #{tpu_custom_call.1} parent=1 // pred_fallthru
      _
    // Predicated region
    $region6: #{tpu_custom_call.1} parent=1 // pred_check
      _
    $region7: #{tpu_custom_call.1} parent=1 // pred_check_branch
      %29 = sbr.rel (0) target = $region9
    $region8: #{tpu_custom_call.1} parent=1 // pred_region
      %s31 = ssub.s32 64, 64
      %32 = vsyncadd [#allocation7], %s31
      %s34 = sshll.u32 [#allocation6], 4
      %s35 = int_to_ptr.vmem [resolvable:$true] %s34
      %37 = dma.hbm_to_vmem [thread:$0]  %s1, 64, %s35, [#allocation7]
    $region9: #{tpu_custom_call.1} parent=1 // pred_fallthru
      _
    // Predicated region
    $region10: #{tpu_custom_call.1} parent=1 // pred_check
      _
    $region11: #{tpu_custom_call.1} parent=1 // pred_check_branch
      %39 = sbr.rel (0) target = $region13
    $region12: #{tpu_custom_call.1} parent=1 // pred_region
      _
    $region13: #{tpu_custom_call.1} parent=1 // pred_fallthru
      _
    // Predicated region
    $region14: #{tpu_custom_call.1} parent=1 // pred_check
      _
    $region15: #{tpu_custom_call.1} parent=1 // pred_check_branch
      %41 = sbr.rel (0) target = $region17
    $region16: #{tpu_custom_call.1} parent=1 // pred_region
      %s43 = ssub.s32 1024, 1024
      %44 = vsyncadd [#allocation7], %s43
      %s45 = sshll.u32 [#allocation8], 4
      %s46 = int_to_ptr.vmem [resolvable:$true] %s45
      %51 = dma.hbm_to_vmem [thread:$0]  %s3, 1024, %s46, [#allocation7], 64, 64, 4
    $region17: #{tpu_custom_call.1} parent=1 // pred_fallthru
      _
    // Predicated region
    $region18: #{tpu_custom_call.1} parent=1 // pred_check
      _
    $region19: #{tpu_custom_call.1} parent=1 // pred_check_branch
      %53 = sbr.rel (0) target = $region21
    $region20: #{tpu_custom_call.1} parent=1 // pred_region
      _
    $region21: #{tpu_custom_call.1} parent=1 // pred_fallthru
      _
    // Predicated region
    $region22: #{tpu_custom_call.1} parent=1 // pred_check
      _
    $region23: #{tpu_custom_call.1} parent=1 // pred_check_branch
      %55 = sbr.rel (0) target = $region25
    $region24: #{tpu_custom_call.1} parent=1 // pred_region
      %s57 = ssub.s32 2048, 2048
      %58 = vsyncadd [#allocation10], %s57
      %s59 = sshll.u32 [#allocation9], 4
      %s60 = int_to_ptr.vmem [resolvable:$true] %s59
      %65 = dma.hbm_to_vmem [thread:$0]  %s5, 2048, %s60, [#allocation10], 128, 128, 8
    $region25: #{tpu_custom_call.1} parent=1 // pred_fallthru
      _
    // Predicated region
    $region26: #{tpu_custom_call.1} parent=1 // pred_check
      _
    $region27: #{tpu_custom_call.1} parent=1 // pred_check_branch
      %67 = sbr.rel (0) target = $region29
    $region28: #{tpu_custom_call.1} parent=1 // pred_region
      _
    $region29: #{tpu_custom_call.1} parent=1 // pred_fallthru
      _
    // Predicated region
    $region30: #{tpu_custom_call.1} parent=1 // pred_check
      _
    $region31: #{tpu_custom_call.1} parent=1 // pred_check_branch
      %69 = sbr.rel (0) target = $region33
    $region32: #{tpu_custom_call.1} parent=1 // pred_region
      %s71 = ssub.s32 2048, 2048
      %72 = vsyncadd [#allocation10], %s71
      %s73 = sshll.u32 [#allocation11], 4
      %s74 = int_to_ptr.vmem [resolvable:$true] %s73
      %79 = dma.hbm_to_vmem [thread:$0]  %s7, 2048, %s74, [#allocation10], 64, 64, 4
    $region33: #{tpu_custom_call.1} parent=1 // pred_fallthru
      _
    // Predicated region
    $region34: #{tpu_custom_call.1} parent=1 // pred_check
      _
    $region35: #{tpu_custom_call.1} parent=1 // pred_check_branch
      %81 = sbr.rel (0) target = $region37
    $region36: #{tpu_custom_call.1} parent=1 // pred_region
      _
    $region37: #{tpu_custom_call.1} parent=1 // pred_fallthru
      _
    // Predicated region
    $region38: #{tpu_custom_call.1} parent=1 // pred_check
      _
    $region39: #{tpu_custom_call.1} parent=1 // pred_check_branch
      %83 = sbr.rel (0) target = $region41
    $region40: #{tpu_custom_call.1} parent=1 // pred_region
      %84 = dma.done [#allocation4], 128
    $region41: #{tpu_custom_call.1} parent=1 // pred_fallthru
      _
    // Predicated region
    $region42: #{tpu_custom_call.1} parent=1 // pred_check
      _
    $region43: #{tpu_custom_call.1} parent=1 // pred_check_branch
      %86 = sbr.rel (0) target = $region45
    $region44: #{tpu_custom_call.1} parent=1 // pred_region
      %87 = dma.done [#allocation7], 64
    $region45: #{tpu_custom_call.1} parent=1 // pred_fallthru
      _
    // Predicated region
    $region46: #{tpu_custom_call.1} parent=1 // pred_check
      _
    $region47: #{tpu_custom_call.1} parent=1 // pred_check_branch
      %89 = sbr.rel (0) target = $region49
    $region48: #{tpu_custom_call.1} parent=1 // pred_region
      %90 = dma.done [#allocation7], 1024
    $region49: #{tpu_custom_call.1} parent=1 // pred_fallthru
      _
    // Predicated region
    $region50: #{tpu_custom_call.1} parent=1 // pred_check
      _
    $region51: #{tpu_custom_call.1} parent=1 // pred_check_branch
      %92 = sbr.rel (0) target = $region53
    $region52: #{tpu_custom_call.1} parent=1 // pred_region
      %93 = dma.done [#allocation10], 2048
    $region53: #{tpu_custom_call.1} parent=1 // pred_fallthru
      _
    // Predicated region
    $region54: #{tpu_custom_call.1} parent=1 // pred_check
      _
    $region55: #{tpu_custom_call.1} parent=1 // pred_check_branch
      %95 = sbr.rel (0) target = $region57
    $region56: #{tpu_custom_call.1} parent=1 // pred_region
      %96 = dma.done [#allocation10], 2048
    $region57: #{tpu_custom_call.1} parent=1 // pred_fallthru
      _
    %v98 = vld [vmem:[#allocation3] sm:$0xff]
    %v99 = vpack.c.bf16 %v98, %v98
    %v100 = vld [vmem:[#allocation6] sm:$0xf]
    %v101 = vld [vmem:[%s2] sm:$0x1]
    %v103 = vlaneseq
    %v104 = vshrl.u32 %v103, 7
    %v105 = vsub.s32 0, %v104
    %v106 = vrot.slane %v101, %v105
    %vm108 = vcmask 64512
    %v110 = vsel %vm108, %v99, 0
    %vm112 = vcmask 1043456
    %v114 = vsel %vm112, %v100, 0
    %116 = vmatprep.subr.bf16.mxu0 0
    %117 = vmatpush1.bf16.msra.mxu0 %v114
    %118 = vmatprep.subr.bf16.mxu0 0
    %119 = vmatpush1.bf16.msra.mxu0 0
    %120 = vmatprep.subr.bf16.mxu0 0
    %121 = vmatpush1.bf16.msra.mxu0 0
    %122 = vmatprep.subr.bf16.mxu0 0
    %123 = vmatpush1.bf16.msra.mxu0 0
    %124 = vmatprep.subr.bf16.mxu0 0
    %125 = vmatpush1.bf16.msra.mxu0 0
    %126 = vmatprep.subr.bf16.mxu0 0
    %127 = vmatpush1.bf16.msra.mxu0 0
    %128 = vmatprep.subr.bf16.mxu0 0
    %129 = vmatpush1.bf16.msra.mxu0 0
    %130 = vmatprep.subr.bf16.mxu0 0
    %131 = vmatpush1.bf16.msra.mxu0 0
    %132 = vmatprep.subr.bf16.mxu0 0
    %133 = vmatpush1.bf16.msra.mxu0 0
    %134 = vmatprep.subr.bf16.mxu0 0
    %135 = vmatpush1.bf16.msra.mxu0 0
    %136 = vmatprep.subr.bf16.mxu0 0
    %137 = vmatpush1.bf16.msra.mxu0 0
    %138 = vmatprep.subr.bf16.mxu0 0
    %139 = vmatpush1.bf16.msra.mxu0 0
    %140 = vmatprep.subr.bf16.mxu0 0
    %141 = vmatpush1.bf16.msra.mxu0 0
    %142 = vmatprep.subr.bf16.mxu0 0
    %143 = vmatpush1.bf16.msra.mxu0 0
    %144 = vmatprep.subr.bf16.mxu0 0
    %145 = vmatpush1.bf16.msra.mxu0 0
    %146 = vmatprep.subr.bf16.mxu0 0
    %147 = vmatpush1.bf16.msra.mxu0 0
    %148 = vmatprep.mubr.bf16.mxu0 0
    %149 = vmatmul.mubr.bf16.gmra.mrb[0].mxu0 %v110
    %v150 = vpop.f32.mrb[0].mxu0
    %v151 = vadd.f32 %v106, %v150
    %v152 = vpop.f32.mrb[0].mxu0
    %v153 = vpop.f32.mrb[0].mxu0
    %v154 = vpop.f32.mrb[0].mxu0
    %155 = vdwg.mxu0
    %v156 = vmax.f32 %v151, 0.0
    %v157 = vpack.c.bf16 %v156, %v156
    %158 = vst [vmem:[#allocation2] sm:$0xf] %v157
    %v159 = vld [vmem:[#allocation2] sm:$0xf]
    %v160 = vld [vmem:[#allocation8] sm:$0xf]
    %v161 = vld [vmem:[#allocation8 + $0x4] sm:$0xf]
    %v162 = vld [vmem:[#allocation8 + $0x8] sm:$0xf]
    %v163 = vld [vmem:[#allocation8 + $0xc] sm:$0xf]
    %v164 = vld [vmem:[#allocation8 + $0x10] sm:$0xf]
    %v165 = vld [vmem:[#allocation8 + $0x14] sm:$0xf]
    %v166 = vld [vmem:[#allocation8 + $0x18] sm:$0xf]
    %v167 = vld [vmem:[#allocation8 + $0x1c] sm:$0xf]
    %v168 = vld [vmem:[#allocation8 + $0x20] sm:$0xf]
    %v169 = vld [vmem:[#allocation8 + $0x24] sm:$0xf]
    %v170 = vld [vmem:[#allocation8 + $0x28] sm:$0xf]
    %v171 = vld [vmem:[#allocation8 + $0x2c] sm:$0xf]
    %v172 = vld [vmem:[#allocation8 + $0x30] sm:$0xf]
    %v173 = vld [vmem:[#allocation8 + $0x34] sm:$0xf]
    %v174 = vld [vmem:[#allocation8 + $0x38] sm:$0xf]
    %v175 = vld [vmem:[#allocation8 + $0x3c] sm:$0xf]
    %v176 = vld [vmem:[%s4] sm:$0x1]
    %v178 = vlaneseq
    %v179 = vshrl.u32 %v178, 7
    %v180 = vsub.s32 0, %v179
    %v181 = vrot.slane %v176, %v180
    %v199 = vunpack.c.l.b16 %v160
    %v200 = vunpack.c.l.b16 %v161
    %v201 = vunpack.c.l.b16 %v162
    %v202 = vunpack.c.l.b16 %v163
    %v203 = vunpack.c.l.b16 %v164
    %v204 = vunpack.c.l.b16 %v165
    %v205 = vunpack.c.l.b16 %v166
    %v206 = vunpack.c.l.b16 %v167
    %v207 = vunpack.c.l.b16 %v168
    %v208 = vunpack.c.l.b16 %v169
    %v209 = vunpack.c.l.b16 %v170
    %v210 = vunpack.c.l.b16 %v171
    %v211 = vunpack.c.l.b16 %v172
    %v212 = vunpack.c.l.b16 %v173
    %v213 = vunpack.c.l.b16 %v174
    %v214 = vunpack.c.l.b16 %v175
    %v215 = vpack.c.b16 %v200, %v199
    %v216 = vpack.c.b16 %v202, %v201
    %v217 = vpack.c.b16 %v204, %v203
    %v218 = vpack.c.b16 %v206, %v205
    %v219 = vpack.c.b16 %v208, %v207
    %v220 = vpack.c.b16 %v210, %v209
    %v221 = vpack.c.b16 %v212, %v211
    %v222 = vpack.c.b16 %v214, %v213
    %231 = vmatprep.subr.bf16.mxu0 0
    %232 = vmatpush1.bf16.msra.mxu0 %v215
    %233 = vmatprep.subr.bf16.mxu0 0
    %234 = vmatpush1.bf16.msra.mxu0 %v216
    %235 = vmatprep.subr.bf16.mxu0 0
    %236 = vmatpush1.bf16.msra.mxu0 %v217
    %237 = vmatprep.subr.bf16.mxu0 0
    %238 = vmatpush1.bf16.msra.mxu0 %v218
    %239 = vmatprep.subr.bf16.mxu0 0
    %240 = vmatpush1.bf16.msra.mxu0 %v219
    %241 = vmatprep.subr.bf16.mxu0 0
    %242 = vmatpush1.bf16.msra.mxu0 %v220
    %243 = vmatprep.subr.bf16.mxu0 0
    %244 = vmatpush1.bf16.msra.mxu0 %v221
    %245 = vmatprep.subr.bf16.mxu0 0
    %246 = vmatpush1.bf16.msra.mxu0 %v222
    %247 = vmatprep.subr.bf16.mxu0 0
    %248 = vmatpush1.bf16.msra.mxu0 0
    %249 = vmatprep.subr.bf16.mxu0 0
    %250 = vmatpush1.bf16.msra.mxu0 0
    %251 = vmatprep.subr.bf16.mxu0 0
    %252 = vmatpush1.bf16.msra.mxu0 0
    %253 = vmatprep.subr.bf16.mxu0 0
    %254 = vmatpush1.bf16.msra.mxu0 0
    %255 = vmatprep.subr.bf16.mxu0 0
    %256 = vmatpush1.bf16.msra.mxu0 0
    %257 = vmatprep.subr.bf16.mxu0 0
    %258 = vmatpush1.bf16.msra.mxu0 0
    %259 = vmatprep.subr.bf16.mxu0 0
    %260 = vmatpush1.bf16.msra.mxu0 0
    %261 = vmatprep.subr.bf16.mxu0 0
    %262 = vmatpush1.bf16.msra.mxu0 0
    %263 = vmatprep.mubr.bf16.mxu0 0
    %264 = vmatmul.mubr.bf16.gmra.mrb[0].mxu0 %v159
    %v265 = vpop.f32.mrb[0].mxu0
    %v266 = vadd.f32 %v181, %v265
    %v267 = vpop.f32.mrb[0].mxu0
    %v268 = vpop.f32.mrb[0].mxu0
    %v269 = vpop.f32.mrb[0].mxu0
    %270 = vdwg.mxu0
    %v271 = vmax.f32 %v266, 0.0
    %v272 = vpack.c.bf16 %v271, %v271
    %273 = vst [vmem:[#allocation2] sm:$0xf] %v272
    %v274 = vld [vmem:[#allocation2] sm:$0xf]
    %v275 = vld [vmem:[#allocation9] sm:$0xff]
    %v276 = vld [vmem:[#allocation9 + $0x8] sm:$0xff]
    %v277 = vld [vmem:[#allocation9 + $0x10] sm:$0xff]
    %v278 = vld [vmem:[#allocation9 + $0x18] sm:$0xff]
    %v279 = vld [vmem:[#allocation9 + $0x20] sm:$0xff]
    %v280 = vld [vmem:[#allocation9 + $0x28] sm:$0xff]
    %v281 = vld [vmem:[#allocation9 + $0x30] sm:$0xff]
    %v282 = vld [vmem:[#allocation9 + $0x38] sm:$0xff]
    %v283 = vld [vmem:[#allocation9 + $0x40] sm:$0xff]
    %v284 = vld [vmem:[#allocation9 + $0x48] sm:$0xff]
    %v285 = vld [vmem:[#allocation9 + $0x50] sm:$0xff]
    %v286 = vld [vmem:[#allocation9 + $0x58] sm:$0xff]
    %v287 = vld [vmem:[#allocation9 + $0x60] sm:$0xff]
    %v288 = vld [vmem:[#allocation9 + $0x68] sm:$0xff]
    %v289 = vld [vmem:[#allocation9 + $0x70] sm:$0xff]
    %v290 = vld [vmem:[#allocation9 + $0x78] sm:$0xff]
    %v291 = vld [vmem:[%s6] sm:$0x3]
    %v293 = vlaneseq
    %v294 = vshrl.u32 %v293, 7
    %v295 = vsub.s32 0, %v294
    %v296 = vrot.slane %v291, %v295
    %v297 = vlaneseq
    %v298 = vshrl.u32 %v297, 7
    %v299 = vsub.s32 1, %v298
    %v300 = vrot.slane %v291, %v299
    %v319 = vunpack.c.l.b16 %v275
    %v320 = vunpack.c.h.b16 %v275
    %v321 = vunpack.c.l.b16 %v276
    %v322 = vunpack.c.h.b16 %v276
    %v323 = vunpack.c.l.b16 %v277
    %v324 = vunpack.c.h.b16 %v277
    %v325 = vunpack.c.l.b16 %v278
    %v326 = vunpack.c.h.b16 %v278
    %v327 = vunpack.c.l.b16 %v279
    %v328 = vunpack.c.h.b16 %v279
    %v329 = vunpack.c.l.b16 %v280
    %v330 = vunpack.c.h.b16 %v280
    %v331 = vunpack.c.l.b16 %v281
    %v332 = vunpack.c.h.b16 %v281
    %v333 = vunpack.c.l.b16 %v282
    %v334 = vunpack.c.h.b16 %v282
    %v335 = vunpack.c.l.b16 %v283
    %v336 = vunpack.c.h.b16 %v283
    %v337 = vunpack.c.l.b16 %v284
    %v338 = vunpack.c.h.b16 %v284
    %v339 = vunpack.c.l.b16 %v285
    %v340 = vunpack.c.h.b16 %v285
    %v341 = vunpack.c.l.b16 %v286
    %v342 = vunpack.c.h.b16 %v286
    %v343 = vunpack.c.l.b16 %v287
    %v344 = vunpack.c.h.b16 %v287
    %v345 = vunpack.c.l.b16 %v288
    %v346 = vunpack.c.h.b16 %v288
    %v347 = vunpack.c.l.b16 %v289
    %v348 = vunpack.c.h.b16 %v289
    %v349 = vunpack.c.l.b16 %v290
    %v350 = vunpack.c.h.b16 %v290
    %v351 = vpack.c.b16 %v321, %v319
    %v352 = vpack.c.b16 %v322, %v320
    %v353 = vpack.c.b16 %v325, %v323
    %v354 = vpack.c.b16 %v326, %v324
    %v355 = vpack.c.b16 %v329, %v327
    %v356 = vpack.c.b16 %v330, %v328
    %v357 = vpack.c.b16 %v333, %v331
    %v358 = vpack.c.b16 %v334, %v332
    %v359 = vpack.c.b16 %v337, %v335
    %v360 = vpack.c.b16 %v338, %v336
    %v361 = vpack.c.b16 %v341, %v339
    %v362 = vpack.c.b16 %v342, %v340
    %v363 = vpack.c.b16 %v345, %v343
    %v364 = vpack.c.b16 %v346, %v344
    %v365 = vpack.c.b16 %v349, %v347
    %v366 = vpack.c.b16 %v350, %v348
    %383 = vmatprep.subr.bf16.mxu0 %v352
    %384 = vmatpush1.bf16.msra.mxu0 %v351
    %385 = vmatprep.subr.bf16.mxu0 %v354
    %386 = vmatpush1.bf16.msra.mxu0 %v353
    %387 = vmatprep.subr.bf16.mxu0 %v356
    %388 = vmatpush1.bf16.msra.mxu0 %v355
    %389 = vmatprep.subr.bf16.mxu0 %v358
    %390 = vmatpush1.bf16.msra.mxu0 %v357
    %391 = vmatprep.subr.bf16.mxu0 %v360
    %392 = vmatpush1.bf16.msra.mxu0 %v359
    %393 = vmatprep.subr.bf16.mxu0 %v362
    %394 = vmatpush1.bf16.msra.mxu0 %v361
    %395 = vmatprep.subr.bf16.mxu0 %v364
    %396 = vmatpush1.bf16.msra.mxu0 %v363
    %397 = vmatprep.subr.bf16.mxu0 %v366
    %398 = vmatpush1.bf16.msra.mxu0 %v365
    %399 = vmatprep.subr.bf16.mxu0 0
    %400 = vmatpush1.bf16.msra.mxu0 0
    %401 = vmatprep.subr.bf16.mxu0 0
    %402 = vmatpush1.bf16.msra.mxu0 0
    %403 = vmatprep.subr.bf16.mxu0 0
    %404 = vmatpush1.bf16.msra.mxu0 0
    %405 = vmatprep.subr.bf16.mxu0 0
    %406 = vmatpush1.bf16.msra.mxu0 0
    %407 = vmatprep.subr.bf16.mxu0 0
    %408 = vmatpush1.bf16.msra.mxu0 0
    %409 = vmatprep.subr.bf16.mxu0 0
    %410 = vmatpush1.bf16.msra.mxu0 0
    %411 = vmatprep.subr.bf16.mxu0 0
    %412 = vmatpush1.bf16.msra.mxu0 0
    %413 = vmatprep.subr.bf16.mxu0 0
    %414 = vmatpush1.bf16.msra.mxu0 0
    %415 = vmatprep.mubr.bf16.mxu0 0
    %416 = vmatmul.mubr.bf16.gmra.mrb[0].mxu0 %v274
    %v417 = vpop.f32.mrb[0].mxu0
    %v418 = vadd.f32 %v296, %v417
    %v419 = vpop.f32.mrb[0].mxu0
    %v420 = vadd.f32 %v300, %v419
    %v421 = vpop.f32.mrb[0].mxu0
    %v422 = vpop.f32.mrb[0].mxu0
    %423 = vdwg.mxu0
    %v424 = vmax.f32 %v418, 0.0
    %v425 = vmax.f32 %v420, 0.0
    %v426 = vpack.c.bf16 %v424, %v424
    %v427 = vpack.c.bf16 %v425, %v425
    %v430 = vunpack.c.l.b16 %v426
    %v431 = vunpack.c.l.b16 %v427
    %v432 = vpack.c.b16 %v431, %v430
    %434 = vst [vmem:[#allocation2] sm:$0xff] %v432
    %v435 = vld [vmem:[#allocation2] sm:$0xff]
    %v436 = vld [vmem:[#allocation11] sm:$0xf]
    %v437 = vld [vmem:[#allocation11 + $0x4] sm:$0xf]
    %v438 = vld [vmem:[#allocation11 + $0x8] sm:$0xf]
    %v439 = vld [vmem:[#allocation11 + $0xc] sm:$0xf]
    %v440 = vld [vmem:[#allocation11 + $0x10] sm:$0xf]
    %v441 = vld [vmem:[#allocation11 + $0x14] sm:$0xf]
    %v442 = vld [vmem:[#allocation11 + $0x18] sm:$0xf]
    %v443 = vld [vmem:[#allocation11 + $0x1c] sm:$0xf]
    %v444 = vld [vmem:[#allocation11 + $0x20] sm:$0xf]
    %v445 = vld [vmem:[#allocation11 + $0x24] sm:$0xf]
    %v446 = vld [vmem:[#allocation11 + $0x28] sm:$0xf]
    %v447 = vld [vmem:[#allocation11 + $0x2c] sm:$0xf]
    %v448 = vld [vmem:[#allocation11 + $0x30] sm:$0xf]
    %v449 = vld [vmem:[#allocation11 + $0x34] sm:$0xf]
    %v450 = vld [vmem:[#allocation11 + $0x38] sm:$0xf]
    %v451 = vld [vmem:[#allocation11 + $0x3c] sm:$0xf]
    %v452 = vld [vmem:[#allocation11 + $0x40] sm:$0xf]
    %v453 = vld [vmem:[#allocation11 + $0x44] sm:$0xf]
    %v454 = vld [vmem:[#allocation11 + $0x48] sm:$0xf]
    %v455 = vld [vmem:[#allocation11 + $0x4c] sm:$0xf]
    %v456 = vld [vmem:[#allocation11 + $0x50] sm:$0xf]
    %v457 = vld [vmem:[#allocation11 + $0x54] sm:$0xf]
    %v458 = vld [vmem:[#allocation11 + $0x58] sm:$0xf]
    %v459 = vld [vmem:[#allocation11 + $0x5c] sm:$0xf]
    %v460 = vld [vmem:[#allocation11 + $0x60] sm:$0xf]
    %v461 = vld [vmem:[#allocation11 + $0x64] sm:$0xf]
    %v462 = vld [vmem:[#allocation11 + $0x68] sm:$0xf]
    %v463 = vld [vmem:[#allocation11 + $0x6c] sm:$0xf]
    %v464 = vld [vmem:[#allocation11 + $0x70] sm:$0xf]
    %v465 = vld [vmem:[#allocation11 + $0x74] sm:$0xf]
    %v466 = vld [vmem:[#allocation11 + $0x78] sm:$0xf]
    %v467 = vld [vmem:[#allocation11 + $0x7c] sm:$0xf]
    %v468 = vld [vmem:[%s8] sm:$0x1]
    %v470 = vlaneseq
    %v471 = vshrl.u32 %v470, 7
    %v472 = vsub.s32 0, %v471
    %v473 = vrot.slane %v468, %v472
    %v476 = vunpack.c.l.b16 %v435
    %v477 = vunpack.c.h.b16 %v435
    %v478 = vpack.c.b16 %v476, %v476
    %v479 = vpack.c.b16 %v477, %v477
    %v514 = vunpack.c.l.b16 %v436
    %v515 = vunpack.c.l.b16 %v437
    %v516 = vunpack.c.l.b16 %v438
    %v517 = vunpack.c.l.b16 %v439
    %v518 = vunpack.c.l.b16 %v440
    %v519 = vunpack.c.l.b16 %v441
    %v520 = vunpack.c.l.b16 %v442
    %v521 = vunpack.c.l.b16 %v443
    %v522 = vunpack.c.l.b16 %v444
    %v523 = vunpack.c.l.b16 %v445
    %v524 = vunpack.c.l.b16 %v446
    %v525 = vunpack.c.l.b16 %v447
    %v526 = vunpack.c.l.b16 %v448
    %v527 = vunpack.c.l.b16 %v449
    %v528 = vunpack.c.l.b16 %v450
    %v529 = vunpack.c.l.b16 %v451
    %v530 = vunpack.c.l.b16 %v452
    %v531 = vunpack.c.l.b16 %v453
    %v532 = vunpack.c.l.b16 %v454
    %v533 = vunpack.c.l.b16 %v455
    %v534 = vunpack.c.l.b16 %v456
    %v535 = vunpack.c.l.b16 %v457
    %v536 = vunpack.c.l.b16 %v458
    %v537 = vunpack.c.l.b16 %v459
    %v538 = vunpack.c.l.b16 %v460
    %v539 = vunpack.c.l.b16 %v461
    %v540 = vunpack.c.l.b16 %v462
    %v541 = vunpack.c.l.b16 %v463
    %v542 = vunpack.c.l.b16 %v464
    %v543 = vunpack.c.l.b16 %v465
    %v544 = vunpack.c.l.b16 %v466
    %v545 = vunpack.c.l.b16 %v467
    %v546 = vpack.c.b16 %v515, %v514
    %v547 = vpack.c.b16 %v517, %v516
    %v548 = vpack.c.b16 %v519, %v518
    %v549 = vpack.c.b16 %v521, %v520
    %v550 = vpack.c.b16 %v523, %v522
    %v551 = vpack.c.b16 %v525, %v524
    %v552 = vpack.c.b16 %v527, %v526
    %v553 = vpack.c.b16 %v529, %v528
    %v554 = vpack.c.b16 %v531, %v530
    %v555 = vpack.c.b16 %v533, %v532
    %v556 = vpack.c.b16 %v535, %v534
    %v557 = vpack.c.b16 %v537, %v536
    %v558 = vpack.c.b16 %v539, %v538
    %v559 = vpack.c.b16 %v541, %v540
    %v560 = vpack.c.b16 %v543, %v542
    %v561 = vpack.c.b16 %v545, %v544
    %578 = vmatprep.subr.bf16.mxu0 0
    %579 = vmatpush1.bf16.msra.mxu0 %v546
    %580 = vmatprep.subr.bf16.mxu0 0
    %581 = vmatpush1.bf16.msra.mxu0 %v547
    %582 = vmatprep.subr.bf16.mxu0 0
    %583 = vmatpush1.bf16.msra.mxu0 %v548
    %584 = vmatprep.subr.bf16.mxu0 0
    %585 = vmatpush1.bf16.msra.mxu0 %v549
    %586 = vmatprep.subr.bf16.mxu0 0
    %587 = vmatpush1.bf16.msra.mxu0 %v550
    %588 = vmatprep.subr.bf16.mxu0 0
    %589 = vmatpush1.bf16.msra.mxu0 %v551
    %590 = vmatprep.subr.bf16.mxu0 0
    %591 = vmatpush1.bf16.msra.mxu0 %v552
    %592 = vmatprep.subr.bf16.mxu0 0
    %593 = vmatpush1.bf16.msra.mxu0 %v553
    %594 = vmatprep.subr.bf16.mxu0 0
    %595 = vmatpush1.bf16.msra.mxu0 %v554
    %596 = vmatprep.subr.bf16.mxu0 0
    %597 = vmatpush1.bf16.msra.mxu0 %v555
    %598 = vmatprep.subr.bf16.mxu0 0
    %599 = vmatpush1.bf16.msra.mxu0 %v556
    %600 = vmatprep.subr.bf16.mxu0 0
    %601 = vmatpush1.bf16.msra.mxu0 %v557
    %602 = vmatprep.subr.bf16.mxu0 0
    %603 = vmatpush1.bf16.msra.mxu0 %v558
    %604 = vmatprep.subr.bf16.mxu0 0
    %605 = vmatpush1.bf16.msra.mxu0 %v559
    %606 = vmatprep.subr.bf16.mxu0 0
    %607 = vmatpush1.bf16.msra.mxu0 %v560
    %608 = vmatprep.subr.bf16.mxu0 0
    %609 = vmatpush1.bf16.msra.mxu0 %v561
    %610 = vmatprep.mubr.bf16.mxu0 %v479
    %611 = vmatmul.mubr.bf16.gmra.mrb[0].mxu0 %v478
    %v612 = vpop.f32.mrb[0].mxu0
    %v613 = vadd.f32 %v473, %v612
    %v614 = vpop.f32.mrb[0].mxu0
    %v615 = vpop.f32.mrb[0].mxu0
    %v616 = vpop.f32.mrb[0].mxu0
    %617 = vdwg.mxu0
    %v618 = vpack.c.bf16 %v613, %v613
    %619 = vst [vmem:[#allocation12] sm:$0xf] %v618
    // Predicated region
    $region58: #{tpu_custom_call.1} parent=1 // pred_check
      _
    $region59: #{tpu_custom_call.1} parent=1 // pred_check_branch
      %621 = sbr.rel (0) target = $region61
    $region60: #{tpu_custom_call.1} parent=1 // pred_region
      %s623 = ssub.s32 64, 64
      %624 = vsyncadd [#allocation5], %s623
      %s626 = sshll.u32 [#allocation12], 4
      %s627 = int_to_ptr.vmem [resolvable:$true] %s626
      %629 = dma.vmem_to_hbm [thread:$0]  %s627, 64, %s9, [#allocation5]
    $region61: #{tpu_custom_call.1} parent=1 // pred_fallthru
      _
    // Predicated region
    $region62: #{tpu_custom_call.1} parent=1 // pred_check
      _
    $region63: #{tpu_custom_call.1} parent=1 // pred_check_branch
      %631 = sbr.rel (0) target = $region65
    $region64: #{tpu_custom_call.1} parent=1 // pred_region
      %632 = dma.done [#allocation5], 64
    $region65: #{tpu_custom_call.1} parent=1 // pred_fallthru
      _
    %633 = vsyncpa [#allocation4], 1
    %634 = vsyncpa [#allocation7], 1
    %635 = vsyncpa [#allocation10], 1
    %636 = vsyncpa [#allocation5], 1

</llo_original>
